<compile_context>
chip_gen: v7x
topology: tpu7x:2x2x1
jax: 0.10.0
libtpu: 0.0.40
codegen_flags: <defaults>
</compile_context>

<pallas_src>
import functools
import math

import jax
import jax.numpy as jnp
from jax.experimental import pallas as pl
from jax.experimental.pallas import tpu as pltpu


# ---------------------------------------------------------------------------
# kernels
# ---------------------------------------------------------------------------

def _pe_rows_kernel(exp_ref, phase_ref, o_ref, *, tile_t: int):
    """One (tile_t, dim_model) tile of the PE table (natural row layout)."""
    i = pl.program_id(0)
    # absolute sequence positions for this tile: (tile_t, 1) sublane iota
    pos = (jax.lax.broadcasted_iota(jnp.int32, (tile_t, 1), 0)
           + i * tile_t).astype(jnp.float32)
    # exp_ref / phase_ref are (1, dim_model) column constants
    angle = pos * exp_ref[...] + phase_ref[...]
    # sin(x + pi/2) == cos(x): one transcendental per element.
    # TODO(synk): on VALU-bound v6e/v7x a per-vreg angle-rotation recurrence
    # (~4 FMAs/elem) could replace the sin polynomial, at the cost of a
    # loop-carried dependence and accumulated rounding error; not done here.
    o_ref[...] = jnp.sin(angle).astype(o_ref.dtype)


def _pe_flat_kernel(exp_scaled_ref, bias_ref, o_ref, *, tile_r: int):
    """One (tile_r, 128) tile of the lane-dense flat slab (D | 128, ppr = 128//D).

    flat element (row, lane): position = row*ppr + lane//D, feature d = lane%D.
    Per-lane constants are folded in the wrapper:
        exp_scaled[lane] = ppr * exp_term[lane % D]
        bias[lane]       = (lane // D) * exp_term[lane % D] + phase[lane % D]
    so angle = row * exp_scaled + bias  (one mul + one add per element).
    """
    i = pl.program_id(0)
    row = (jax.lax.broadcasted_iota(jnp.int32, (tile_r, 1), 0)
           + i * tile_r).astype(jnp.float32)
    angle = row * exp_scaled_ref[...] + bias_ref[...]
    o_ref[...] = jnp.sin(angle).astype(o_ref.dtype)


# ---------------------------------------------------------------------------
# wrapper
# ---------------------------------------------------------------------------

def _round_up(x: int, m: int) -> int:
    return ((x + m - 1) // m) * m


def _pick_tile_rows(total_rows: int, row_bytes: int, *, align: int = 8,
                    target_bytes: int = 4 << 20, min_steps: int = 4) -> int:
    """Tile rows: a multiple of `align`, or == total_rows (single full block).

    Targets ~4 MiB output tiles (double-buffered output = 8 MiB, fits the
    default scoped-VMEM limit on all generations), but when the whole table is
    >= 4 MiB the tile is capped so the grid has >= min_steps iterations, giving
    each of v7x's two TensorCores >= 2 pipelined steps under
    dimension_semantics=("parallel",).
    """
    total_rows = int(total_rows)
    row_bytes = max(int(row_bytes), 1)
    total_bytes = total_rows * row_bytes
    tgt = target_bytes
    if total_bytes >= (min_steps << 20):              # enough work: >= min_steps tiles
        tgt = min(tgt, total_bytes // min_steps)
    t = max(align, (tgt // row_bytes) // align * align)
    if t >= total_rows:
        return total_rows                              # single block == full array dim
    return int(t)


def positional_encoding(maxlen: int, dim_model: int, *,
                        out_dtype=jnp.float32, _tile_rows=None) -> jax.Array:
    """Equivalent of PositionalEncoding(dim_model).forward(maxlen).

    Returns (1, maxlen, dim_model); default float32 matches the PyTorch module.
    `out_dtype=jnp.bfloat16` halves the HBM writeback when the consumer allows it.
    `_tile_rows` is a test-only override of the row tile.
    """
    assert dim_model % 2 == 0, "odd dim_model unsupported (same as reference)"
    assert maxlen >= 1

    itemsize = jnp.dtype(out_dtype).itemsize
    align = 16 if itemsize == 2 else 8                 # bf16 packs 16 sublanes/vreg

    # Column-only constants, computed once in plain JAX (hoisted out of kernel).
    neg_log_scale = -(math.log(10000.0) / float(dim_model))
    d = jnp.arange(dim_model, dtype=jnp.int32)
    exp_term = jnp.exp((2.0 * (d // 2).astype(jnp.float32)) * neg_log_scale)   # (D,)
    phase = (d % 2).astype(jnp.float32) * (math.pi / 2.0)                      # (D,)

    params = pltpu.CompilerParams(dimension_semantics=("parallel",))

    # Lane-dense flat path only when it yields EXACTLY maxlen positions
    # (no wrapper slice ever).
    flat_ok = (dim_model < 128 and 128 % dim_model == 0
               and maxlen % (128 // dim_model) == 0)

    if flat_ok:
        # ---- lane-dense flat slab: (rows, 128), ppr positions per 128-lane row
        ppr = 128 // dim_model
        rows = maxlen // ppr                           # exact: no padding, no slice
        tile_r = (_tile_rows if _tile_rows is not None
                  else _pick_tile_rows(rows, 128 * itemsize, align=align))
        grid = pl.cdiv(rows, tile_r)                   # last block may be partial

        exp_lane = jnp.tile(exp_term, ppr)                                     # (128,)
        phase_lane = jnp.tile(phase, ppr)                                      # (128,)
        posoff = (jnp.arange(128, dtype=jnp.int32) // dim_model
                  ).astype(jnp.float32)                                        # (128,)
        exp_scaled = (float(ppr) * exp_lane)[None, :]                          # (1,128)
        bias = (posoff * exp_lane + phase_lane)[None, :]                       # (1,128)

        kernel = functools.partial(_pe_flat_kernel, tile_r=tile_r)
        const_spec = pl.BlockSpec((1, 128), lambda i: (0, 0))
        flat = pl.pallas_call(
            kernel,
            out_shape=jax.ShapeDtypeStruct((rows, 128), out_dtype),
            grid_spec=pltpu.PrefetchScalarGridSpec(
                num_scalar_prefetch=0,
                grid=(grid,),
                in_specs=[const_spec, const_spec],
                out_specs=pl.BlockSpec((tile_r, 128), lambda i: (i, 0)),
            ),
            compiler_params=params,
        )(exp_scaled, bias)
        pe = flat.reshape(maxlen, dim_model)           # contiguous reshape (free)
    else:
        # ---- natural (T, D) layout; lane-dense whenever D % 128 == 0
        tile_t = (_tile_rows if _tile_rows is not None
                  else _pick_tile_rows(maxlen, dim_model * itemsize, align=align))
        grid = pl.cdiv(maxlen, tile_t)                 # last block may be partial

        kernel = functools.partial(_pe_rows_kernel, tile_t=tile_t)
        const_spec = pl.BlockSpec((1, dim_model), lambda i: (0, 0))
        pe = pl.pallas_call(
            kernel,
            out_shape=jax.ShapeDtypeStruct((maxlen, dim_model), out_dtype),
            grid_spec=pltpu.PrefetchScalarGridSpec(
                num_scalar_prefetch=0,
                grid=(grid,),
                in_specs=[const_spec, const_spec],
                out_specs=pl.BlockSpec((tile_t, dim_model), lambda i: (i, 0)),
            ),
            compiler_params=params,
        )(exp_term[None, :], phase[None, :])

    return pe[None, :, :]                              # (1, maxlen, dim_model)


# ---------------------------------------------------------------------------
# pure-JAX reference (mirrors the PyTorch __init__ construction)
# ---------------------------------------------------------------------------

def _reference_pe(maxlen: int, dim_model: int) -> jnp.ndarray:
    position = jnp.arange(0, maxlen, dtype=jnp.float32)[:, None]
    exp_term = jnp.exp(
        jnp.arange(0, dim_model, 2, dtype=jnp.float32)
        * -(math.log(10000.0) / dim_model)
    )
    pe = jnp.zeros((maxlen, dim_model), dtype=jnp.float32)
    pe = pe.at[:, 0::2].set(jnp.sin(position * exp_term))
    pe = pe.at[:, 1::2].set(jnp.cos(position * exp_term))
    return pe[None]


if __name__ == "__main__":
    # Module has no learnable params; the PE table is deterministic.
    # (PRNGKey kept only to follow the harness convention.)
    _ = jax.random.PRNGKey(0)

    # 1) flat lane-dense path (D < 128), exact rows, no wrapper slice.
    D, T = 32, 16
    out = jax.block_until_ready(positional_encoding(T, D))
    ref = _reference_pe(T, D)
    assert out.shape == (1, T, D), out.shape
    assert out.dtype == jnp.float32
    assert jnp.allclose(out, ref, atol=5e-5, rtol=5e-5), "mismatch (flat path)"

    # 2) natural path: D multiple of 128, maxlen not a multiple of 8
    #    (single full block equal to the array dims).
    D2, T2 = 256, 40
    out2 = jax.block_until_ready(positional_encoding(T2, D2))
    assert out2.shape == (1, T2, D2), out2.shape
    assert jnp.allclose(out2, _reference_pe(T2, D2), atol=5e-5, rtol=5e-5), \
        "mismatch (rows path)"

    # 3) ragged final output block, natural path (Pallas partial writeback).
    D3, T3 = 128, 20
    out3 = jax.block_until_ready(positional_encoding(T3, D3, _tile_rows=8))
    assert jnp.allclose(out3, _reference_pe(T3, D3), atol=5e-5, rtol=5e-5), \
        "mismatch (ragged rows path)"

    # 4) ragged final output block, flat path.
    D4, T4 = 32, 48
    out4 = jax.block_until_ready(positional_encoding(T4, D4, _tile_rows=8))
    assert jnp.allclose(out4, _reference_pe(T4, D4), atol=5e-5, rtol=5e-5), \
        "mismatch (ragged flat path)"

    # 5) bf16 output path (halves HBM writeback on v5e).
    D5, T5 = 64, 32
    out5 = jax.block_until_ready(
        positional_encoding(T5, D5, out_dtype=jnp.bfloat16))
    assert out5.dtype == jnp.bfloat16
    assert jnp.allclose(out5.astype(jnp.float32), _reference_pe(T5, D5),
                        atol=2e-2), "mismatch (bf16 path)"

    print("KERNEL_OK")
</pallas_src>

<mosaic_0001>
module attributes {stable_mosaic.version = 11 : i64} {
  func.func @_pe_flat_kernel(%arg0: i32, %arg1: memref<1x128xf32, #tpu.memory_space<vmem>>, %arg2: memref<1x128xf32, #tpu.memory_space<vmem>>, %arg3: memref<4x128xf32, #tpu.memory_space<vmem>>) attributes {dimension_semantics = [#tpu.dimension_semantics<parallel>], iteration_bounds = array<i64: 1>, scalar_prefetch = 0 : i64, scratch_operands = 0 : i64, tpu.core_type = #tpu.core_type<tc>, window_params = [{pipeline_mode = #tpu.pipeline_mode<synchronous>, transform_indices = @transform_0, window_bounds = array<i64: 1, 128>}, {pipeline_mode = #tpu.pipeline_mode<synchronous>, transform_indices = @transform_1, window_bounds = array<i64: 1, 128>}, {transform_indices = @transform_2, window_bounds = array<i64: 4, 128>}]} {
    %0 = tpu.iota {dimensions = array<i32: 0>} : vector<4x1xi32>
    %c4_i32 = arith.constant 4 : i32
    %1 = arith.muli %arg0, %c4_i32 : i32
    %2 = vector.broadcast %1 : i32 to vector<4x1xi32>
    %3 = arith.addi %0, %2 : vector<4x1xi32>
    %4 = arith.sitofp %3 : vector<4x1xi32> to vector<4x1xf32>
    %c0 = arith.constant 0 : index
    %c0_0 = arith.constant 0 : index
    %5 = vector.load %arg1[%c0, %c0_0] : memref<1x128xf32, #tpu.memory_space<vmem>>, vector<1x128xf32>
    %6 = vector.broadcast %4 : vector<4x1xf32> to vector<4x128xf32>
    %7 = vector.broadcast %5 : vector<1x128xf32> to vector<4x128xf32>
    %8 = arith.mulf %6, %7 : vector<4x128xf32>
    %c0_1 = arith.constant 0 : index
    %c0_2 = arith.constant 0 : index
    %9 = vector.load %arg2[%c0_1, %c0_2] : memref<1x128xf32, #tpu.memory_space<vmem>>, vector<1x128xf32>
    %10 = vector.broadcast %9 : vector<1x128xf32> to vector<4x128xf32>
    %11 = arith.addf %8, %10 : vector<4x128xf32>
    %12 = math.sin %11 : vector<4x128xf32>
    %c0_3 = arith.constant 0 : index
    %c0_4 = arith.constant 0 : index
    %13 = vector.load %arg3[%c0_3, %c0_4] : memref<4x128xf32, #tpu.memory_space<vmem>>, vector<4x128xf32>
    tpu.vector_store %arg3[%c0_3, %c0_4], %12 {strides = array<i32>} : memref<4x128xf32, #tpu.memory_space<vmem>>, vector<4x128xf32>,
    return
  }
  func.func @transform_0(%arg0: i32) -> (i32, i32) {
    %c0_i32 = arith.constant 0 : i32
    %c0_i32_0 = arith.constant 0 : i32
    %c0_i32_1 = arith.constant 0 : i32
    return %c0_i32, %c0_i32_0 : i32, i32
  }
  func.func @transform_1(%arg0: i32) -> (i32, i32) {
    %c0_i32 = arith.constant 0 : i32
    %c0_i32_0 = arith.constant 0 : i32
    %c0_i32_1 = arith.constant 0 : i32
    return %c0_i32, %c0_i32_0 : i32, i32
  }
  func.func @transform_2(%arg0: i32) -> (i32, i32) {
    %c0_i32 = arith.constant 0 : i32
    %c0_i32_0 = arith.constant 0 : i32
    return %arg0, %c0_i32 : i32, i32
  }
}

</mosaic_0001>

<llo_original>
// kernel: tpu_custom_call.1
$region0: #{tpu_custom_call.1}
  #allocation0 [shape = 'u32[]', space=smem, size = 0x4, offset = 0x4, fixed_abs, tag = 'smem constant byte address 0x4 - core index']
  #allocation1 [shape = 'u32[144,128]{1,0:T(1,128)}', space=vmem, size = 0x12000, scoped, tag = 'internal scratch']
  %s0 = inlined_call_operand.hbm [shape: f32[1,128], index: 0, kind: input, shape index: {}]
  %s1 = inlined_call_operand.vmem [shape: f32[1,128], index: 1, kind: input, shape index: {}]
  %s2 = inlined_call_operand.hbm [shape: f32[4,128], index: 2, kind: output, shape index: {}]
  %s3 = sld [smem:[#allocation0]]
  $region22: #{tpu_custom_call.1} parent=0
    _
  %s5 = ssub.s32 1, %s3
  %s6 = scalar_select 0, %s5, %s3
  $region1: #{tpu_custom_call.1} parent=0
    #allocation2 [shape = 'u8[512]{0}', space=vmem, size = 0x400, scoped, tag = 'input window, operand 0, single buffered']
    #allocation3 [shape = 's32[1]{0}', space=sflag, size = 0x4, scoped, tag = 'scoped memory for tpu_custom_call.1']
    #allocation4 [shape = 's32[1]{0}', space=sflag, size = 0x4, scoped, tag = 'scoped memory for tpu_custom_call.1']
    #allocation5 [shape = 'u8[2048]{0}', space=vmem, size = 0x800, scoped, tag = 'output window, operand 0, single buffered']
    %7 = vsyncpa [#allocation3], 0
    %8 = vsyncpa [#allocation4], 0
    // Predicated region
    $region2: #{tpu_custom_call.1} parent=1 // pred_check
      _
    $region3: #{tpu_custom_call.1} parent=1 // pred_check_branch
      %10 = sbr.rel (0) target = $region5
    $region4: #{tpu_custom_call.1} parent=1 // pred_region
      %s12 = ssub.s32 16, 16
      %13 = vsyncadd [#allocation3], %s12
      %s15 = sshll.u32 [#allocation2], 4
      %s16 = int_to_ptr.vmem [resolvable:$true] %s15
      %18 = dma.hbm_to_vmem [thread:$0]  %s0, 16, %s16, [#allocation3]
    $region5: #{tpu_custom_call.1} parent=1 // pred_fallthru
      _
    // Predicated region
    $region6: #{tpu_custom_call.1} parent=1 // pred_check
      _
    $region7: #{tpu_custom_call.1} parent=1 // pred_check_branch
      %20 = sbr.rel (0) target = $region9
    $region8: #{tpu_custom_call.1} parent=1 // pred_region
      _
    $region9: #{tpu_custom_call.1} parent=1 // pred_fallthru
      _
    // Predicated region
    $region10: #{tpu_custom_call.1} parent=1 // pred_check
      _
    $region11: #{tpu_custom_call.1} parent=1 // pred_check_branch
      %22 = sbr.rel (0) target = $region13
    $region12: #{tpu_custom_call.1} parent=1 // pred_region
      %23 = dma.done [#allocation3], 16
    $region13: #{tpu_custom_call.1} parent=1 // pred_fallthru
      _
    %v24 = vlaneseq
    %v25 = vshrl.u32 %v24, 7
    %s26 = smul.u32 0, 4
    %v27 = vstv %s26
    %v28 = vadd.s32 %v25, %v27
    %v29 = vcvt.s32.f32 %v28
    %v30 = vld [vmem:[#allocation2] sm:$0x1]
    %v32 = vlaneseq
    %v33 = vshrl.u32 %v32, 7
    %v34 = vsub.s32 0, %v33
    %v35 = vrot.slane %v30, %v34
    %v37 = vmul.f32 %v29, %v35
    %v38 = vld [vmem:[%s1] sm:$0x1]
    %v40 = vlaneseq
    %v41 = vshrl.u32 %v40, 7
    %v42 = vsub.s32 0, %v41
    %v43 = vrot.slane %v38, %v42
    %v45 = vadd.f32 %v37, %v43
    %v46 = vand.u32 2147483647, %v45
    %vm47 = vcmp.le.f32.partialorder %v46, 0.7853982
    %vm48 = vcmp.lt.s32.totalorder %v45, 0
    %v49 = vand.u32 %v45, 2139095040
    %v50 = vshrl.u32 %v49, 23
    %v51 = vsub.s32 %v50, 127
    %v52 = vand.u32 2147483647, %v45
    %v53 = vand.u32 %v52, 8388607
    %v54 = vor.u32 %v53, 8388608
    %v55 = vsub.s32 0, %v54
    %v56 = vadd.s32 %v51, 1
    %vm57 = vcmp.gt.s32.totalorder %v56, 0
    %v58 = vsel %vm57, %v56, 0
    %v59 = vshrl.u32 %v58, 5
    %v60 = vand.u32 %v58, 31
    %v61 = vsub.s32 32, %v60
    %v62 = vshrl.u32 683565275, %v61
    %v63 = vshll.u32 683565275, %v60
    %v64 = vshrl.u32 2475754826, %v61
    %v65 = vor.u32 %v63, %v64
    %v66 = vshll.u32 2475754826, %v60
    %v67 = vshrl.u32 2131351028, %v61
    %v68 = vor.u32 %v66, %v67
    %v69 = vshll.u32 2131351028, %v60
    %v70 = vshrl.u32 2102212464, %v61
    %v71 = vor.u32 %v69, %v70
    %v72 = vshll.u32 2102212464, %v60
    %v73 = vshrl.u32 920167782, %v61
    %v74 = vor.u32 %v72, %v73
    %v75 = vshll.u32 920167782, %v60
    %v76 = vshrl.u32 1326507024, %v61
    %v77 = vor.u32 %v75, %v76
    %vm78 = vcmp.lt.s32.totalorder %v59, 1
    %vm79 = vcmp.lt.s32.totalorder %v59, 2
    %vm80 = vcmp.lt.s32.totalorder %v59, 3
    %vm81 = vcmp.lt.s32.totalorder %v59, 4
    %v82 = vsel %vm78, %v62, %v65
    %v83 = vsel %vm81, %v71, 2102212464
    %v84 = vsel %vm80, %v68, %v83
    %v85 = vsel %vm79, %v82, %v84
    %v86 = vsel %vm78, %v65, %v68
    %v87 = vsel %vm81, %v74, 920167782
    %v88 = vsel %vm80, %v71, %v87
    %v89 = vsel %vm79, %v86, %v88
    %v90 = vsel %vm78, %v68, %v71
    %v91 = vsel %vm81, %v77, 1326507024
    %v92 = vsel %vm80, %v74, %v91
    %v93 = vsel %vm79, %v90, %v92
    %v94 = vshll.u32 %v54, 8
    %v95 = vmul.u32.u64.compose %v94, %v93
    %v96 = vextract.low.u32 %v95
    %v97 = vextract.high.u32 %v95
    %v98 = vmul.u32.u64.compose %v94, %v89
    %v99 = vextract.low.u32 %v98
    %v100 = vextract.high.u32 %v98
    %v101 = vmul.u32 %v94, %v85
    %v102 = vadd.s32 %v97, %v99
    %vm103 = vc.u32 %v97, %v99
    %v104 = vadd.s32 %v100, 1
    %v105 = vsel %vm103, %v104, %v100
    %v106 = vadd.s32 %v101, %v105
    %v107 = vadd.s32 %v106, 536870912
    %v108 = vshrl.u32 %v107, 30
    %v109 = vshll.u32 %v108, 30
    %v110 = vsub.s32 %v106, %v109
    %vm111 = vcmp.lt.s32.totalorder %v110, 0
    %v112 = vsub.s32 0, %v110
    %v113 = vsel %vm111, %v112, %v110
    %v114 = vclz %v113
    %v115 = vsub.s32 %v114, 2
    %vm116 = vcmp.gt.s32.totalorder 0, %v115
    %v117 = vsel %vm116, 0, %v115
    %v118 = vsub.s32 32, %v117
    %v119 = vshll.u32 %v110, %v117
    %v120 = vshrl.u32 %v102, %v118
    %v121 = vor.u32 %v119, %v120
    %v122 = vsub.s32 4294967266, %v117
    %v123 = vadd.s32 %v122, 127
    %v124 = vshll.u32 %v123, 23
    %v125 = vor.u32 4788187, %v124
    %v126 = vand.u32 2147483647, %v125
    %v128 = vcvt.s32.f32 %v121
    %v129 = vmul.f32 %v128, %v126
    %v130 = vxor.u32 %v129, 2147483648
    %v131 = vsel %vm48, %v130, %v129
    %v132 = vsub.s32 4, %v108
    %v133 = vsel %vm48, %v132, %v108
    %v134 = vsel %vm47, %v45, %v131
    %v135 = vsel %vm47, 0, %v133
    %v136 = vcosq.f32.pop %v134
    %v137 = vsinq.f32.pop %v134
    %vm138 = vweird.f32 %v45
    %v139 = vadd.s32 %v135, 3
    %v140 = vand.u32 %v139, 3
    %vm141 = vcmp.lt.s32.totalorder %v140, 2
    %vm142 = vcmp.eq.s32.totalorder %v140, 0
    %v143 = vxor.u32 %v137, 2147483648
    %v144 = vsel %vm142, %v136, %v143
    %vm145 = vcmp.eq.s32.totalorder %v140, 2
    %v146 = vxor.u32 %v136, 2147483648
    %v147 = vsel %vm145, %v146, %v137
    %v148 = vsel %vm141, %v144, %v147
    %v149 = vsel %vm138, nan, %v148
    %150 = vst [vmem:[#allocation5] sm:$0xf] %v149
    // Predicated region
    $region14: #{tpu_custom_call.1} parent=1 // pred_check
      _
    $region15: #{tpu_custom_call.1} parent=1 // pred_check_branch
      %152 = sbr.rel (0) target = $region17
    $region16: #{tpu_custom_call.1} parent=1 // pred_region
      %s154 = ssub.s32 64, 64
      %155 = vsyncadd [#allocation4], %s154
      %s157 = sshll.u32 [#allocation5], 4
      %s158 = int_to_ptr.vmem [resolvable:$true] %s157
      %160 = dma.vmem_to_hbm [thread:$0]  %s158, 64, %s2, [#allocation4]
    $region17: #{tpu_custom_call.1} parent=1 // pred_fallthru
      _
    // Predicated region
    $region18: #{tpu_custom_call.1} parent=1 // pred_check
      _
    $region19: #{tpu_custom_call.1} parent=1 // pred_check_branch
      %162 = sbr.rel (0) target = $region21
    $region20: #{tpu_custom_call.1} parent=1 // pred_region
      %163 = dma.done [#allocation4], 64
    $region21: #{tpu_custom_call.1} parent=1 // pred_fallthru
      _
    %164 = vsyncpa [#allocation3], 1
    %165 = vsyncpa [#allocation4], 1

</llo_original>
